<compile_context>
chip_gen: v6e
topology: v6e:2x2x1
jax: 0.10.0
libtpu: 0.0.40
codegen_flags: <defaults>
</compile_context>

<pallas_src>
import numpy as np

import jax
import jax.numpy as jnp
from jax.experimental import pallas as pl
from jax.experimental.pallas import tpu as pltpu


# ----------------------------------------------------------------------------
# linear_interpolate_batch as a constant block-diagonal matrix.
#   rows 2t     -> input[t]
#   rows 2t+1   -> (input[t] + input[t+1]) / 2          (t < Tv-1)
#   row  2Tv-1  -> input[Tv-1]   (output[-1] = output[-2], exactly as PyTorch)
# ----------------------------------------------------------------------------
def _interp_matrix(tv: int, nb: int) -> np.ndarray:
    w = np.zeros((2 * tv, tv), dtype=np.float32)
    t = np.arange(tv)
    w[2 * t, t] = 1.0
    if tv > 1:
        t = np.arange(tv - 1)
        w[2 * t + 1, t] = 0.5
        w[2 * t + 1, t + 1] = 0.5
    w[2 * tv - 1, tv - 1] = 1.0
    # block-diagonal over the batch block so one flat 2-D matmul handles NB
    # samples without mixing frames across sample boundaries.
    return np.kron(np.eye(nb, dtype=np.float32), w)


# ----------------------------------------------------------------------------
# Fused per-batch-block kernel.
#   inputs : pic_flat [NB*Tv, Din_v] bf16, mel_flat [NB*Ta, Din_a] bf16,
#            w_vid [Din_v, D] bf16, w_aud [Din_a, D] bf16,
#            w_interp [NB*2Tv, NB*Tv] f32 (constant, resident)
#   outputs: video_features [NB, Tv, D], audio_features (trimmed) [NB, Tc, D],
#            video mean [NB, 1, D], audio mean [NB, 1, D],
#            video_features_double (trimmed) [NB, Tc, D],
#            per-step squared-error partial [1, 1, 1]
# ----------------------------------------------------------------------------
def _emoemb_kernel(pic_ref, mel_ref, wv_ref, wa_ref, wi_ref,
                   vf_ref, af_ref, vmean_ref, amean_ref, vd_ref, lpart_ref):
    nb, tv, d = vf_ref.shape          # batch block, video frames, feature dim
    ta = mel_ref.shape[0] // nb       # audio frames
    tc = vd_ref.shape[1]              # overlap length min(ta, 2*tv)

    # Stub encoders: one 2-D matmul per modality over the whole batch block
    # (bf16 inputs, f32 accumulation on the MXU).
    vf_flat = jnp.dot(pic_ref[...], wv_ref[...],
                      preferred_element_type=jnp.float32)        # (nb*tv, d) f32
    af_flat = jnp.dot(mel_ref[...], wa_ref[...],
                      preferred_element_type=jnp.float32)        # (nb*ta, d) f32

    vf = vf_flat.reshape(nb, tv, d)
    af = af_flat.reshape(nb, ta, d)

    # feature + mean outputs (torch.mean(..., dim=1)); audio mean is taken over
    # the FULL ta window before trimming, matching the PyTorch forward.
    vf_ref[...] = vf
    vmean_ref[...] = jnp.mean(vf, axis=1, keepdims=True)
    amean_ref[...] = jnp.mean(af, axis=1, keepdims=True)

    # audio features written already trimmed to tc: no wasted HBM stores and no
    # wrapper-side slice copy.
    af_t = af[:, :tc, :]
    af_ref[...] = af_t

    # linear_interpolate_batch as ONE MXU matmul with the constant block-diag
    # operator (no concatenate, no row-interleave reshape, no sublane shuffles).
    vd_flat = jnp.dot(wi_ref[...], vf_flat,
                      preferred_element_type=jnp.float32)        # (nb*2tv, d)
    vd = vd_flat.reshape(nb, 2 * tv, d)[:, :tc, :]
    vd_ref[...] = vd

    # fused MSE partial sum over the length-matched overlap (pred - gt),
    # normalized once in the wrapper with a constant multiply.
    diff = (af_t - vd).reshape(nb * tc, d)
    part = jnp.sum(diff * diff, axis=0, keepdims=True)           # (1, d)
    part = jnp.sum(part, axis=1, keepdims=True)                  # (1, 1)
    # TODO(synk): an SMEM scalar output would remove this lane-width-1 masked
    # store entirely; kept as a single tiny VMEM store per grid step for
    # lowering safety.
    lpart_ref[...] = part.reshape(1, 1, 1)


def _pick_batch_block(b: int) -> int:
    # Small B: one big grid step (best on v5e/v6e, which have a single TC).
    # Larger B: keep >= 2 "parallel" grid steps so v7x's two TensorCores both
    # get work, with blocks of at most 8 samples.
    if b <= 8:
        return b
    for nb in range(min(8, b // 2), 0, -1):
        if b % nb == 0:
            return nb
    return 1


# ----------------------------------------------------------------------------
# Wrapper mirroring EmoEmb.forward(train=True) semantics on the stubbed nets.
# ----------------------------------------------------------------------------
def emo_emb_forward(pic, mel, w_vid, w_aud, *, batch_block=None):
    B, Tv, Din_v = pic.shape
    _, Ta, Din_a = mel.shape
    D = w_vid.shape[1]
    T2 = 2 * Tv
    Tc = min(Ta, T2)                       # static overlap length

    nb = _pick_batch_block(B) if batch_block is None else batch_block
    assert B % nb == 0, "batch_block must divide batch size"
    steps = B // nb

    # bf16 MXU inputs (halved DMA bytes, native MXU rate on v6e/v7x; v5e MXU
    # also consumes bf16).  Frame dims are flattened in the wrapper so the
    # kernel runs a single 2-D matmul per modality with no in-kernel bf16
    # relayout.  All post-matmul math stays f32 (v5e VPU has no bf16 lanes).
    pic_flat = pic.reshape(B * Tv, Din_v).astype(jnp.bfloat16)
    mel_flat = mel.reshape(B * Ta, Din_a).astype(jnp.bfloat16)
    wv = w_vid.astype(jnp.bfloat16)
    wa = w_aud.astype(jnp.bfloat16)

    # Constant interpolation operator; kept f32 (exact {1.0, 0.5} weights).
    # Size scales as nb^2 * 2*Tv^2 and is bounded by the nb <= 8 policy.
    wi = jnp.asarray(_interp_matrix(Tv, nb))

    out_shapes = (
        jax.ShapeDtypeStruct((B, Tv, D), jnp.float32),     # video_features
        jax.ShapeDtypeStruct((B, Tc, D), jnp.float32),     # audio_features (trimmed)
        jax.ShapeDtypeStruct((B, 1, D), jnp.float32),      # video mean
        jax.ShapeDtypeStruct((B, 1, D), jnp.float32),      # audio mean (full Ta)
        jax.ShapeDtypeStruct((B, Tc, D), jnp.float32),     # video_features_double
        jax.ShapeDtypeStruct((steps, 1, 1), jnp.float32),  # per-step sq-err partial
    )

    in_specs = [
        pl.BlockSpec((nb * Tv, Din_v), lambda b: (b, 0)),
        pl.BlockSpec((nb * Ta, Din_a), lambda b: (b, 0)),
        # Resident weights / interpolation operator (constant index_map).
        # TODO(synk): on v7x mark these pipeline_mode=pl.Buffered(1) and K-tile
        # real encoder dims (bf16, 256-wide K on v6e/v7x, 128-wide on v5e) with
        # an f32 VMEM accumulator; the stub dims here are tiny so it is skipped.
        pl.BlockSpec((Din_v, D), lambda b: (0, 0)),
        pl.BlockSpec((Din_a, D), lambda b: (0, 0)),
        pl.BlockSpec((nb * T2, nb * Tv), lambda b: (0, 0)),
    ]
    out_specs = (
        pl.BlockSpec((nb, Tv, D), lambda b: (b, 0, 0)),
        pl.BlockSpec((nb, Tc, D), lambda b: (b, 0, 0)),
        pl.BlockSpec((nb, 1, D), lambda b: (b, 0, 0)),
        pl.BlockSpec((nb, 1, D), lambda b: (b, 0, 0)),
        pl.BlockSpec((nb, Tc, D), lambda b: (b, 0, 0)),
        pl.BlockSpec((1, 1, 1), lambda b: (b, 0, 0)),
    )

    # Scoped-VMEM limit sized from the actual per-step block sums (x2 for
    # double-buffering + headroom), capped well below v7x's 64 MiB physical
    # VMEM (v5e/v6e have 128 MiB and could go higher for bigger blocks).
    def _nbytes(shape, dtype):
        n = 1
        for s in shape:
            n *= int(s)
        return n * jnp.dtype(dtype).itemsize

    block_bytes = (
        _nbytes((nb * Tv, Din_v), jnp.bfloat16)
        + _nbytes((nb * Ta, Din_a), jnp.bfloat16)
        + _nbytes((Din_v, D), jnp.bfloat16)
        + _nbytes((Din_a, D), jnp.bfloat16)
        + _nbytes((nb * T2, nb * Tv), jnp.float32)
        + _nbytes((nb, Tv, D), jnp.float32)
        + 2 * _nbytes((nb, Tc, D), jnp.float32)
        + 2 * _nbytes((nb, 1, D), jnp.float32)
        + _nbytes((1, 1, 1), jnp.float32)
    )
    vmem_limit = int(min(max(4 * block_bytes, 16 * 1024 * 1024),
                         48 * 1024 * 1024))

    outs = pl.pallas_call(
        _emoemb_kernel,
        out_shape=out_shapes,
        grid=(steps,),
        in_specs=in_specs,
        out_specs=out_specs,
        compiler_params=pltpu.CompilerParams(
            dimension_semantics=("parallel",),
            vmem_limit_bytes=vmem_limit),
    )(pic_flat, mel_flat, wv, wa, wi)

    vf, af_t, vmean, amean, vd, loss_parts = outs

    # mse_loss: sum(err^2) / (B * Tc * D) — single constant multiply.
    inter_loss = jnp.sum(loss_parts) * (1.0 / float(B * Tc * D))

    ret = {
        "video_features": vf,
        "audio_features": af_t,                      # trimmed in-kernel
        "video_features_mean": jnp.squeeze(vmean, axis=1),
        "audio_features_mean": jnp.squeeze(amean, axis=1),
        "video_features_double": vd,                 # trimmed in-kernel
        "inter_loss": inter_loss,
    }
    return inter_loss, ret


# ----------------------------------------------------------------------------
# Reference (pure JAX / XLA) for a sanity check — same bf16 inputs, f32 math.
# ----------------------------------------------------------------------------
def _reference(pic, mel, w_vid, w_aud):
    vf = jnp.einsum("btk,kd->btd", pic.astype(jnp.bfloat16),
                    w_vid.astype(jnp.bfloat16),
                    preferred_element_type=jnp.float32)
    af = jnp.einsum("btk,kd->btd", mel.astype(jnp.bfloat16),
                    w_aud.astype(jnp.bfloat16),
                    preferred_element_type=jnp.float32)
    B, Tv, D = vf.shape
    vd = jnp.zeros((B, 2 * Tv, D), vf.dtype)
    vd = vd.at[:, 0::2, :].set(vf)
    vd = vd.at[:, 1:-1:2, :].set((vf[:, :-1, :] + vf[:, 1:, :]) * 0.5)
    vd = vd.at[:, -1, :].set(vd[:, -2, :])
    Tc = min(af.shape[1], 2 * Tv)
    err = af[:, :Tc, :] - vd[:, :Tc, :]
    loss = jnp.sum(err ** 2) / (B * Tc * D)
    return (loss, jnp.mean(vf, axis=1), jnp.mean(af, axis=1),
            vd[:, :Tc, :], vf, af[:, :Tc, :])


if __name__ == "__main__":
    key = jax.random.PRNGKey(0)
    k1, k2, k3, k4 = jax.random.split(key, 4)

    B, Tv, Ta = 2, 8, 16          # video frames; audio at ~2x the video rate
    Din, D = 32, 128              # stub encoder in/out dims

    pic = jax.random.normal(k1, (B, Tv, Din), dtype=jnp.float32)
    mel = jax.random.normal(k2, (B, Ta, Din), dtype=jnp.float32)
    w_vid = jax.random.normal(k3, (Din, D), dtype=jnp.float32) * 0.05
    w_aud = jax.random.normal(k4, (Din, D), dtype=jnp.float32) * 0.05

    inter_loss, ret = emo_emb_forward(pic, mel, w_vid, w_aud)
    jax.block_until_ready(inter_loss)
    jax.block_until_ready(ret["video_features_double"])

    # sanity check against the pure-JAX reference (bf16 MXU inputs on both
    # sides, so tolerances only need to absorb accumulation-order noise)
    ref_loss, ref_vmean, ref_amean, ref_vd, ref_vf, ref_af = _reference(
        pic, mel, w_vid, w_aud)
    tol = dict(rtol=1e-3, atol=1e-3)
    assert jnp.allclose(inter_loss, ref_loss, **tol)
    assert jnp.allclose(ret["video_features"], ref_vf, **tol)
    assert jnp.allclose(ret["audio_features"], ref_af, **tol)
    assert jnp.allclose(ret["video_features_mean"], ref_vmean, **tol)
    assert jnp.allclose(ret["audio_features_mean"], ref_amean, **tol)
    assert jnp.allclose(ret["video_features_double"], ref_vd, **tol)

    print("KERNEL_OK")
</pallas_src>

<mosaic_0001>
module attributes {stable_mosaic.version = 11 : i64} {
  func.func @_emoemb_kernel(%arg0: i32, %arg1: memref<16x32xbf16, #tpu.memory_space<vmem>>, %arg2: memref<32x32xbf16, #tpu.memory_space<vmem>>, %arg3: memref<32x128xbf16, #tpu.memory_space<vmem>>, %arg4: memref<32x128xbf16, #tpu.memory_space<vmem>>, %arg5: memref<32x16xf32, #tpu.memory_space<vmem>>, %arg6: memref<2x8x128xf32, #tpu.memory_space<vmem>>, %arg7: memref<2x16x128xf32, #tpu.memory_space<vmem>>, %arg8: memref<2x1x128xf32, #tpu.memory_space<vmem>>, %arg9: memref<2x1x128xf32, #tpu.memory_space<vmem>>, %arg10: memref<2x16x128xf32, #tpu.memory_space<vmem>>, %arg11: memref<1x1x1xf32, #tpu.memory_space<vmem>>) attributes {dimension_semantics = [#tpu.dimension_semantics<parallel>], iteration_bounds = array<i64: 1>, scalar_prefetch = 0 : i64, scratch_operands = 0 : i64, tpu.core_type = #tpu.core_type<tc>, window_params = [{transform_indices = @transform_0, window_bounds = array<i64: 16, 32>}, {transform_indices = @transform_1, window_bounds = array<i64: 32, 32>}, {pipeline_mode = #tpu.pipeline_mode<synchronous>, transform_indices = @transform_2, window_bounds = array<i64: 32, 128>}, {pipeline_mode = #tpu.pipeline_mode<synchronous>, transform_indices = @transform_3, window_bounds = array<i64: 32, 128>}, {pipeline_mode = #tpu.pipeline_mode<synchronous>, transform_indices = @transform_4, window_bounds = array<i64: 32, 16>}, {transform_indices = @transform_5, window_bounds = array<i64: 2, 8, 128>}, {transform_indices = @transform_6, window_bounds = array<i64: 2, 16, 128>}, {transform_indices = @transform_7, window_bounds = array<i64: 2, 1, 128>}, {transform_indices = @transform_8, window_bounds = array<i64: 2, 1, 128>}, {transform_indices = @transform_9, window_bounds = array<i64: 2, 16, 128>}, {transform_indices = @transform_10, window_bounds = array<i64: 1, 1, 1>}]} {
    %c0 = arith.constant 0 : index
    %c0_0 = arith.constant 0 : index
    %0 = vector.load %arg1[%c0, %c0_0] : memref<16x32xbf16, #tpu.memory_space<vmem>>, vector<16x32xbf16>
    %c0_1 = arith.constant 0 : index
    %c0_2 = arith.constant 0 : index
    %1 = vector.load %arg3[%c0_1, %c0_2] : memref<32x128xbf16, #tpu.memory_space<vmem>>, vector<32x128xbf16>
    %cst = arith.constant dense<0.000000e+00> : vector<16x128xf32>
    %2 = tpu.matmul %0, %1, %cst {dimension_numbers = #tpu.dot_dimension_numbers<[1], [0], [0], [1], [0, 0, 1, 1], [], []>} : vector<16x32xbf16>, vector<32x128xbf16>, vector<16x128xf32> -> vector<16x128xf32>
    %c0_3 = arith.constant 0 : index
    %c0_4 = arith.constant 0 : index
    %3 = vector.load %arg2[%c0_3, %c0_4] : memref<32x32xbf16, #tpu.memory_space<vmem>>, vector<32x32xbf16>
    %c0_5 = arith.constant 0 : index
    %c0_6 = arith.constant 0 : index
    %4 = vector.load %arg4[%c0_5, %c0_6] : memref<32x128xbf16, #tpu.memory_space<vmem>>, vector<32x128xbf16>
    %cst_7 = arith.constant dense<0.000000e+00> : vector<32x128xf32>
    %5 = tpu.matmul %3, %4, %cst_7 {dimension_numbers = #tpu.dot_dimension_numbers<[1], [0], [0], [1], [0, 0, 1, 1], [], []>} : vector<32x32xbf16>, vector<32x128xbf16>, vector<32x128xf32> -> vector<32x128xf32>
    %6 = vector.shape_cast %2 : vector<16x128xf32> to vector<2x8x128xf32>
    %7 = vector.shape_cast %5 : vector<32x128xf32> to vector<2x16x128xf32>
    %c0_8 = arith.constant 0 : index
    %c0_9 = arith.constant 0 : index
    %c0_10 = arith.constant 0 : index
    %8 = vector.load %arg6[%c0_8, %c0_9, %c0_10] : memref<2x8x128xf32, #tpu.memory_space<vmem>>, vector<2x8x128xf32>
    tpu.vector_store %arg6[%c0_8, %c0_9, %c0_10], %6 {strides = array<i32>} : memref<2x8x128xf32, #tpu.memory_space<vmem>>, vector<2x8x128xf32>,
    %cst_11 = arith.constant dense<0.000000e+00> : vector<2x128xf32>
    %9 = vector.multi_reduction <add>, %6, %cst_11 [1] : vector<2x8x128xf32> to vector<2x128xf32>
    %10 = vector.shape_cast %9 : vector<2x128xf32> to vector<2x1x128xf32>
    %cst_12 = arith.constant 8.000000e+00 : f32
    %11 = vector.broadcast %cst_12 : f32 to vector<2x1x128xf32>
    %12 = arith.divf %10, %11 : vector<2x1x128xf32>
    %c0_13 = arith.constant 0 : index
    %c0_14 = arith.constant 0 : index
    %c0_15 = arith.constant 0 : index
    %13 = vector.load %arg8[%c0_13, %c0_14, %c0_15] : memref<2x1x128xf32, #tpu.memory_space<vmem>>, vector<2x1x128xf32>
    tpu.vector_store %arg8[%c0_13, %c0_14, %c0_15], %12 {strides = array<i32>} : memref<2x1x128xf32, #tpu.memory_space<vmem>>, vector<2x1x128xf32>,
    %cst_16 = arith.constant dense<0.000000e+00> : vector<2x128xf32>
    %14 = vector.multi_reduction <add>, %7, %cst_16 [1] : vector<2x16x128xf32> to vector<2x128xf32>
    %15 = vector.shape_cast %14 : vector<2x128xf32> to vector<2x1x128xf32>
    %cst_17 = arith.constant 1.600000e+01 : f32
    %16 = vector.broadcast %cst_17 : f32 to vector<2x1x128xf32>
    %17 = arith.divf %15, %16 : vector<2x1x128xf32>
    %c0_18 = arith.constant 0 : index
    %c0_19 = arith.constant 0 : index
    %c0_20 = arith.constant 0 : index
    %18 = vector.load %arg9[%c0_18, %c0_19, %c0_20] : memref<2x1x128xf32, #tpu.memory_space<vmem>>, vector<2x1x128xf32>
    tpu.vector_store %arg9[%c0_18, %c0_19, %c0_20], %17 {strides = array<i32>} : memref<2x1x128xf32, #tpu.memory_space<vmem>>, vector<2x1x128xf32>,
    %c0_21 = arith.constant 0 : index
    %c0_22 = arith.constant 0 : index
    %c0_23 = arith.constant 0 : index
    %19 = vector.load %arg7[%c0_21, %c0_22, %c0_23] : memref<2x16x128xf32, #tpu.memory_space<vmem>>, vector<2x16x128xf32>
    tpu.vector_store %arg7[%c0_21, %c0_22, %c0_23], %7 {strides = array<i32>} : memref<2x16x128xf32, #tpu.memory_space<vmem>>, vector<2x16x128xf32>,
    %c0_24 = arith.constant 0 : index
    %c0_25 = arith.constant 0 : index
    %20 = vector.load %arg5[%c0_24, %c0_25] : memref<32x16xf32, #tpu.memory_space<vmem>>, vector<32x16xf32>
    %cst_26 = arith.constant dense<0.000000e+00> : vector<32x128xf32>
    %21 = tpu.matmul %20, %2, %cst_26 {dimension_numbers = #tpu.dot_dimension_numbers<[1], [0], [0], [1], [0, 0, 1, 1], [], []>} : vector<32x16xf32>, vector<16x128xf32>, vector<32x128xf32> -> vector<32x128xf32>
    %22 = vector.shape_cast %21 : vector<32x128xf32> to vector<2x16x128xf32>
    %c0_27 = arith.constant 0 : index
    %c0_28 = arith.constant 0 : index
    %c0_29 = arith.constant 0 : index
    %23 = vector.load %arg10[%c0_27, %c0_28, %c0_29] : memref<2x16x128xf32, #tpu.memory_space<vmem>>, vector<2x16x128xf32>
    tpu.vector_store %arg10[%c0_27, %c0_28, %c0_29], %22 {strides = array<i32>} : memref<2x16x128xf32, #tpu.memory_space<vmem>>, vector<2x16x128xf32>,
    %24 = arith.subf %7, %22 : vector<2x16x128xf32>
    %25 = vector.shape_cast %24 : vector<2x16x128xf32> to vector<32x128xf32>
    %26 = arith.mulf %25, %25 : vector<32x128xf32>
    %cst_30 = arith.constant dense<0.000000e+00> : vector<128xf32>
    %27 = vector.multi_reduction <add>, %26, %cst_30 [0] : vector<32x128xf32> to vector<128xf32>
    %28 = vector.shape_cast %27 : vector<128xf32> to vector<1x128xf32>
    %cst_31 = arith.constant dense<0.000000e+00> : vector<1xf32>
    %29 = vector.multi_reduction <add>, %28, %cst_31 [1] : vector<1x128xf32> to vector<1xf32>
    %30 = vector.shape_cast %29 : vector<1xf32> to vector<1x1xf32>
    %31 = vector.shape_cast %30 : vector<1x1xf32> to vector<1x1x1xf32>
    %c0_32 = arith.constant 0 : index
    %c0_33 = arith.constant 0 : index
    %c0_34 = arith.constant 0 : index
    %32 = vector.load %arg11[%c0_32, %c0_33, %c0_34] : memref<1x1x1xf32, #tpu.memory_space<vmem>>, vector<1x1x1xf32>
    tpu.vector_store %arg11[%c0_32, %c0_33, %c0_34], %31 {strides = array<i32>} : memref<1x1x1xf32, #tpu.memory_space<vmem>>, vector<1x1x1xf32>,
    return
  }
  func.func @transform_0(%arg0: i32) -> (i32, i32) {
    %c0_i32 = arith.constant 0 : i32
    %c0_i32_0 = arith.constant 0 : i32
    return %arg0, %c0_i32 : i32, i32
  }
  func.func @transform_1(%arg0: i32) -> (i32, i32) {
    %c0_i32 = arith.constant 0 : i32
    %c0_i32_0 = arith.constant 0 : i32
    return %arg0, %c0_i32 : i32, i32
  }
  func.func @transform_2(%arg0: i32) -> (i32, i32) {
    %c0_i32 = arith.constant 0 : i32
    %c0_i32_0 = arith.constant 0 : i32
    %c0_i32_1 = arith.constant 0 : i32
    return %c0_i32, %c0_i32_0 : i32, i32
  }
  func.func @transform_3(%arg0: i32) -> (i32, i32) {
    %c0_i32 = arith.constant 0 : i32
    %c0_i32_0 = arith.constant 0 : i32
    %c0_i32_1 = arith.constant 0 : i32
    return %c0_i32, %c0_i32_0 : i32, i32
  }
  func.func @transform_4(%arg0: i32) -> (i32, i32) {
    %c0_i32 = arith.constant 0 : i32
    %c0_i32_0 = arith.constant 0 : i32
    %c0_i32_1 = arith.constant 0 : i32
    return %c0_i32, %c0_i32_0 : i32, i32
  }
  func.func @transform_5(%arg0: i32) -> (i32, i32, i32) {
    %c0_i32 = arith.constant 0 : i32
    %c0_i32_0 = arith.constant 0 : i32
    %c0_i32_1 = arith.constant 0 : i32
    return %arg0, %c0_i32, %c0_i32_0 : i32, i32, i32
  }
  func.func @transform_6(%arg0: i32) -> (i32, i32, i32) {
    %c0_i32 = arith.constant 0 : i32
    %c0_i32_0 = arith.constant 0 : i32
    %c0_i32_1 = arith.constant 0 : i32
    return %arg0, %c0_i32, %c0_i32_0 : i32, i32, i32
  }
  func.func @transform_7(%arg0: i32) -> (i32, i32, i32) {
    %c0_i32 = arith.constant 0 : i32
    %c0_i32_0 = arith.constant 0 : i32
    %c0_i32_1 = arith.constant 0 : i32
    return %arg0, %c0_i32, %c0_i32_0 : i32, i32, i32
  }
  func.func @transform_8(%arg0: i32) -> (i32, i32, i32) {
    %c0_i32 = arith.constant 0 : i32
    %c0_i32_0 = arith.constant 0 : i32
    %c0_i32_1 = arith.constant 0 : i32
    return %arg0, %c0_i32, %c0_i32_0 : i32, i32, i32
  }
  func.func @transform_9(%arg0: i32) -> (i32, i32, i32) {
    %c0_i32 = arith.constant 0 : i32
    %c0_i32_0 = arith.constant 0 : i32
    %c0_i32_1 = arith.constant 0 : i32
    return %arg0, %c0_i32, %c0_i32_0 : i32, i32, i32
  }
  func.func @transform_10(%arg0: i32) -> (i32, i32, i32) {
    %c0_i32 = arith.constant 0 : i32
    %c0_i32_0 = arith.constant 0 : i32
    %c0_i32_1 = arith.constant 0 : i32
    return %arg0, %c0_i32, %c0_i32_0 : i32, i32, i32
  }
}

</mosaic_0001>

<llo_original>
// kernel: tpu_custom_call.1
$region0: #{tpu_custom_call.1}
  #allocation0 [shape = 'u32[]', space=smem, size = 0x4, offset = 0x4, fixed_abs, tag = 'smem constant byte address 0x4 - core index']
  #allocation1 [shape = 'u32[144,128]{1,0:T(1,128)}', space=vmem, size = 0x12000, scoped, tag = 'internal scratch']
  %s0 = inlined_call_operand.hbm [shape: bf16[16,32], index: 0, kind: input, shape index: {}]
  %s1 = inlined_call_operand.vmem [shape: bf16[32,32], index: 1, kind: input, shape index: {}]
  %s2 = inlined_call_operand.vmem [shape: bf16[32,128], index: 2, kind: input, shape index: {}]
  %s3 = inlined_call_operand.vmem [shape: bf16[32,128], index: 3, kind: input, shape index: {}]
  %s4 = inlined_call_operand.vmem [shape: f32[32,16], index: 4, kind: input, shape index: {}]
  %s5 = inlined_call_operand.hbm [shape: f32[2,8,128], index: 5, kind: output, shape index: {0}]
  %s6 = inlined_call_operand.hbm [shape: f32[2,16,128], index: 6, kind: output, shape index: {1}]
  %s7 = inlined_call_operand.hbm [shape: f32[2,1,128], index: 7, kind: output, shape index: {2}]
  %s8 = inlined_call_operand.hbm [shape: f32[2,1,128], index: 8, kind: output, shape index: {3}]
  %s9 = inlined_call_operand.hbm [shape: f32[2,16,128], index: 9, kind: output, shape index: {4}]
  %s10 = inlined_call_operand.hbm [shape: f32[1,1,1], index: 10, kind: output, shape index: {5}]
  %11 = xla_tuple %s5, %s6, %s7, %s8, %s9, %s10
  %s12 = sld [smem:[#allocation0]]
  $region74: #{tpu_custom_call.1} parent=0
    _
  %s14 = ssub.s32 1, %s12
  %s15 = scalar_select 0, %s14, %s12
  $region1: #{tpu_custom_call.1} parent=0
    #allocation2 [shape = 'u8[4096]{0}', space=vmem, size = 0x1000, scoped, tag = 'input window, operand 0, single buffered']
    #allocation3 [shape = 's32[1]{0}', space=sflag, size = 0x4, scoped, tag = 'scoped memory for tpu_custom_call.1']
    #allocation4 [shape = 's32[1]{0}', space=sflag, size = 0x4, scoped, tag = 'scoped memory for tpu_custom_call.1']
    #allocation5 [shape = 'u8[8192]{0}', space=vmem, size = 0x2000, scoped, tag = 'output window, operand 0, single buffered']
    #allocation6 [shape = 'u8[16384]{0}', space=vmem, size = 0x4000, scoped, tag = 'output window, operand 1, single buffered']
    #allocation7 [shape = 's32[1]{0}', space=sflag, size = 0x4, scoped, tag = 'scoped memory for tpu_custom_call.1']
    #allocation8 [shape = 'u8[1024]{0}', space=vmem, size = 0x400, scoped, tag = 'output window, operand 2, single buffered']
    #allocation9 [shape = 'u8[1024]{0}', space=vmem, size = 0x400, scoped, tag = 'output window, operand 3, single buffered']
    #allocation10 [shape = 's32[1]{0}', space=sflag, size = 0x4, scoped, tag = 'scoped memory for tpu_custom_call.1']
    #allocation11 [shape = 'u8[16384]{0}', space=vmem, size = 0x4000, scoped, tag = 'output window, operand 4, single buffered']
    #allocation12 [shape = 'u8[512]{0}', space=vmem, size = 0x400, scoped, tag = 'output window, operand 5, single buffered']
    #allocation13 [shape = 's32[1]{0}', space=sflag, size = 0x4, scoped, tag = 'scoped memory for tpu_custom_call.1']
    %16 = vsyncpa [#allocation3], 0
    %17 = vsyncpa [#allocation4], 0
    %18 = vsyncpa [#allocation7], 0
    %19 = vsyncpa [#allocation10], 0
    %20 = vsyncpa [#allocation13], 0
    // Predicated region
    $region2: #{tpu_custom_call.1} parent=1 // pred_check
      _
    $region3: #{tpu_custom_call.1} parent=1 // pred_check_branch
      %22 = sbr.rel (0) target = $region5
    $region4: #{tpu_custom_call.1} parent=1 // pred_region
      %s24 = ssub.s32 128, 128
      %25 = vsyncadd [#allocation3], %s24
      %s26 = sshll.u32 [#allocation2], 4
      %s27 = int_to_ptr.vmem [resolvable:$true] %s26
      %32 = dma.hbm_to_vmem [thread:$0]  %s0, 128, %s27, [#allocation3], 64, 64, 4
    $region5: #{tpu_custom_call.1} parent=1 // pred_fallthru
      _
    // Predicated region
    $region6: #{tpu_custom_call.1} parent=1 // pred_check
      _
    $region7: #{tpu_custom_call.1} parent=1 // pred_check_branch
      %34 = sbr.rel (0) target = $region9
    $region8: #{tpu_custom_call.1} parent=1 // pred_region
      _
    $region9: #{tpu_custom_call.1} parent=1 // pred_fallthru
      _
    // Predicated region
    $region10: #{tpu_custom_call.1} parent=1 // pred_check
      _
    $region11: #{tpu_custom_call.1} parent=1 // pred_check_branch
      %36 = sbr.rel (0) target = $region13
    $region12: #{tpu_custom_call.1} parent=1 // pred_region
      _
    $region13: #{tpu_custom_call.1} parent=1 // pred_fallthru
      _
    // Predicated region
    $region14: #{tpu_custom_call.1} parent=1 // pred_check
      _
    $region15: #{tpu_custom_call.1} parent=1 // pred_check_branch
      %38 = sbr.rel (0) target = $region17
    $region16: #{tpu_custom_call.1} parent=1 // pred_region
      _
    $region17: #{tpu_custom_call.1} parent=1 // pred_fallthru
      _
    // Predicated region
    $region18: #{tpu_custom_call.1} parent=1 // pred_check
      _
    $region19: #{tpu_custom_call.1} parent=1 // pred_check_branch
      %40 = sbr.rel (0) target = $region21
    $region20: #{tpu_custom_call.1} parent=1 // pred_region
      _
    $region21: #{tpu_custom_call.1} parent=1 // pred_fallthru
      _
    // Predicated region
    $region22: #{tpu_custom_call.1} parent=1 // pred_check
      _
    $region23: #{tpu_custom_call.1} parent=1 // pred_check_branch
      %42 = sbr.rel (0) target = $region25
    $region24: #{tpu_custom_call.1} parent=1 // pred_region
      %43 = dma.done [#allocation3], 128
    $region25: #{tpu_custom_call.1} parent=1 // pred_fallthru
      _
    %v45 = vld [vmem:[#allocation2] sm:$0xf]
    %v46 = vld [vmem:[#allocation2 + $0x4] sm:$0xf]
    %v47 = vld [vmem:[%s2] sm:$0xf]
    %v48 = vld [vmem:[%s2 + $0x4] sm:$0xf]
    %v49 = vld [vmem:[%s2 + $0x8] sm:$0xf]
    %v50 = vld [vmem:[%s2 + $0xc] sm:$0xf]
    %v53 = vunpack.c.l.b16 %v45
    %v54 = vunpack.c.l.b16 %v46
    %v55 = vpack.c.b16 %v54, %v53
    %v60 = vunpack.c.l.b16 %v47
    %v61 = vunpack.c.l.b16 %v48
    %v62 = vunpack.c.l.b16 %v49
    %v63 = vunpack.c.l.b16 %v50
    %v64 = vpack.c.b16 %v61, %v60
    %v65 = vpack.c.b16 %v63, %v62
    %vm68 = vcmask 261120
    %v70 = vsel %vm68, %v55, 0
    %72 = vmatprep.subr.bf16.mxu0 0
    %73 = vmatpush1.bf16.msra.mxu0 0
    %74 = vmatprep.subr.bf16.mxu0 0
    %75 = vmatpush1.bf16.msra.mxu0 0
    %76 = vmatprep.subr.bf16.mxu0 0
    %77 = vmatpush1.bf16.msra.mxu0 0
    %78 = vmatprep.subr.bf16.mxu0 0
    %79 = vmatpush1.bf16.msra.mxu0 0
    %80 = vmatprep.subr.bf16.mxu0 0
    %81 = vmatpush1.bf16.msra.mxu0 0
    %82 = vmatprep.subr.bf16.mxu0 0
    %83 = vmatpush1.bf16.msra.mxu0 0
    %84 = vmatprep.subr.bf16.mxu0 0
    %85 = vmatpush1.bf16.msra.mxu0 %v65
    %86 = vmatprep.subr.bf16.mxu0 0
    %87 = vmatpush1.bf16.msra.mxu0 %v64
    %88 = vmatprep.subr.bf16.mxu0 0
    %89 = vmatpush2.bf16.msra.mxu0 0
    %90 = vmatprep.subr.bf16.mxu0 0
    %91 = vmatpush2.bf16.msra.mxu0 0
    %92 = vmatprep.subr.bf16.mxu0 0
    %93 = vmatpush2.bf16.msra.mxu0 0
    %94 = vmatprep.subr.bf16.mxu0 0
    %95 = vmatpush2.bf16.msra.mxu0 0
    %96 = vmatprep.subr.bf16.mxu0 0
    %97 = vmatpush2.bf16.msra.mxu0 0
    %98 = vmatprep.subr.bf16.mxu0 0
    %99 = vmatpush2.bf16.msra.mxu0 0
    %100 = vmatprep.subr.bf16.mxu0 0
    %101 = vmatpush2.bf16.msra.mxu0 0
    %102 = vmatprep.subr.bf16.mxu0 0
    %103 = vmatpush2.bf16.msra.mxu0 0
    %104 = vmatprep.mubr.bf16.mxu0 0
    %105 = vmatmul.mubr.bf16.gmra.mxu0 %v70
    %v106 = vpop.f32.mrf.mxu0
    %v107 = vadd.f32 0.0, %v106
    %v108 = vpop.f32.mrf.mxu0
    %v109 = vpop.f32.mrf.mxu0
    %v110 = vadd.f32 0.0, %v109
    %v111 = vpop.f32.mrf.mxu0
    %112 = vdwg.mxu0
    %v113 = vld [vmem:[%s1] sm:$0xf]
    %v114 = vld [vmem:[%s1 + $0x4] sm:$0xf]
    %v115 = vld [vmem:[%s1 + $0x8] sm:$0xf]
    %v116 = vld [vmem:[%s1 + $0xc] sm:$0xf]
    %v117 = vld [vmem:[%s3] sm:$0xf]
    %v118 = vld [vmem:[%s3 + $0x4] sm:$0xf]
    %v119 = vld [vmem:[%s3 + $0x8] sm:$0xf]
    %v120 = vld [vmem:[%s3 + $0xc] sm:$0xf]
    %v125 = vunpack.c.l.b16 %v113
    %v126 = vunpack.c.l.b16 %v114
    %v127 = vunpack.c.l.b16 %v115
    %v128 = vunpack.c.l.b16 %v116
    %v129 = vpack.c.b16 %v126, %v125
    %v130 = vpack.c.b16 %v128, %v127
    %v135 = vunpack.c.l.b16 %v117
    %v136 = vunpack.c.l.b16 %v118
    %v137 = vunpack.c.l.b16 %v119
    %v138 = vunpack.c.l.b16 %v120
    %v139 = vpack.c.b16 %v136, %v135
    %v140 = vpack.c.b16 %v138, %v137
    %v144 = vsel %vm68, %v129, 0
    %v147 = vsel %vm68, %v130, 0
    %149 = vmatprep.subr.bf16.mxu0 0
    %150 = vmatpush1.bf16.msra.mxu0 0
    %151 = vmatprep.subr.bf16.mxu0 0
    %152 = vmatpush1.bf16.msra.mxu0 0
    %153 = vmatprep.subr.bf16.mxu0 0
    %154 = vmatpush1.bf16.msra.mxu0 0
    %155 = vmatprep.subr.bf16.mxu0 0
    %156 = vmatpush1.bf16.msra.mxu0 0
    %157 = vmatprep.subr.bf16.mxu0 0
    %158 = vmatpush1.bf16.msra.mxu0 0
    %159 = vmatprep.subr.bf16.mxu0 0
    %160 = vmatpush1.bf16.msra.mxu0 0
    %161 = vmatprep.subr.bf16.mxu0 0
    %162 = vmatpush1.bf16.msra.mxu0 %v140
    %163 = vmatprep.subr.bf16.mxu0 0
    %164 = vmatpush1.bf16.msra.mxu0 %v139
    %165 = vmatprep.subr.bf16.mxu0 0
    %166 = vmatpush2.bf16.msra.mxu0 0
    %167 = vmatprep.subr.bf16.mxu0 0
    %168 = vmatpush2.bf16.msra.mxu0 0
    %169 = vmatprep.subr.bf16.mxu0 0
    %170 = vmatpush2.bf16.msra.mxu0 0
    %171 = vmatprep.subr.bf16.mxu0 0
    %172 = vmatpush2.bf16.msra.mxu0 0
    %173 = vmatprep.subr.bf16.mxu0 0
    %174 = vmatpush2.bf16.msra.mxu0 0
    %175 = vmatprep.subr.bf16.mxu0 0
    %176 = vmatpush2.bf16.msra.mxu0 0
    %177 = vmatprep.subr.bf16.mxu0 0
    %178 = vmatpush2.bf16.msra.mxu0 0
    %179 = vmatprep.subr.bf16.mxu0 0
    %180 = vmatpush2.bf16.msra.mxu0 0
    %181 = vmatprep.mubr.bf16.mxu0 0
    %182 = vmatmul.mubr.bf16.gmra.mxu0 %v144
    %v183 = vpop.f32.mrf.mxu0
    %v184 = vadd.f32 0.0, %v183
    %v185 = vpop.f32.mrf.mxu0
    %v186 = vpop.f32.mrf.mxu0
    %v187 = vadd.f32 0.0, %v186
    %v188 = vpop.f32.mrf.mxu0
    %189 = vmatprep.mubr.bf16.mxu0 0
    %190 = vmatmul.mubr.bf16.gmra.mxu0 %v147
    %v191 = vpop.f32.mrf.mxu0
    %v192 = vadd.f32 0.0, %v191
    %v193 = vpop.f32.mrf.mxu0
    %v194 = vpop.f32.mrf.mxu0
    %v195 = vadd.f32 0.0, %v194
    %v196 = vpop.f32.mrf.mxu0
    %197 = vdwg.mxu0
    %198 = vst [vmem:[#allocation5] sm:$0xff] %v107
    %199 = vst [vmem:[#allocation5 + $0x8] sm:$0xff] %v110
    %v200 = vrot.slane %v107, 4
    %v201 = vadd.f32 %v107, %v200
    %v202 = vrot.slane %v201, 2
    %v203 = vadd.f32 %v201, %v202
    %v204 = vrot.slane %v203, 1
    %v205 = vadd.f32 %v203, %v204
    %v206 = vrot.slane %v110, 4
    %v207 = vadd.f32 %v110, %v206
    %v208 = vrot.slane %v207, 2
    %v209 = vadd.f32 %v207, %v208
    %v210 = vrot.slane %v209, 1
    %v211 = vadd.f32 %v209, %v210
    %v212 = vrcp.pop 8.0
    %v213 = vmul.f32 %v205, %v212
    %v214 = vmul.f32 %v211, %v212
    %215 = vst [vmem:[#allocation8] sm:$0x1] %v213
    %216 = vst [vmem:[#allocation8 + $0x1] sm:$0x1] %v214
    %v217 = vadd.f32 %v184, %v187
    %v218 = vrot.slane %v217, 4
    %v219 = vadd.f32 %v217, %v218
    %v220 = vrot.slane %v219, 2
    %v221 = vadd.f32 %v219, %v220
    %v222 = vrot.slane %v221, 1
    %v223 = vadd.f32 %v221, %v222
    %v224 = vadd.f32 %v192, %v195
    %v225 = vrot.slane %v224, 4
    %v226 = vadd.f32 %v224, %v225
    %v227 = vrot.slane %v226, 2
    %v228 = vadd.f32 %v226, %v227
    %v229 = vrot.slane %v228, 1
    %v230 = vadd.f32 %v228, %v229
    %v231 = vrcp.pop 16.0
    %v232 = vmul.f32 %v223, %v231
    %v233 = vmul.f32 %v230, %v231
    %234 = vst [vmem:[#allocation9] sm:$0x1] %v232
    %235 = vst [vmem:[#allocation9 + $0x1] sm:$0x1] %v233
    %236 = vst [vmem:[#allocation6] sm:$0xff] %v184
    %237 = vst [vmem:[#allocation6 + $0x8] sm:$0xff] %v187
    %238 = vst [vmem:[#allocation6 + $0x10] sm:$0xff] %v192
    %239 = vst [vmem:[#allocation6 + $0x18] sm:$0xff] %v195
    %v240 = vld [vmem:[%s4] sm:$0xff]
    %v241 = vld [vmem:[%s4 + $0x8] sm:$0xff]
    %v242 = vld [vmem:[%s4 + $0x10] sm:$0xff]
    %v243 = vld [vmem:[%s4 + $0x18] sm:$0xff]
    %vm244 = vcmask 130048
    %v246 = vsel %vm244, %v240, 0
    %v249 = vsel %vm244, %v241, 0
    %v252 = vsel %vm244, %v242, 0
    %v255 = vsel %vm244, %v243, 0
    %257 = vmatprep.subr.mxu0 0.0
    %258 = vmatpush1.msra.mxu0 0.0
    %259 = vmatprep.subr.mxu0 0.0
    %260 = vmatpush1.msra.mxu0 0.0
    %261 = vmatprep.subr.mxu0 0.0
    %262 = vmatpush1.msra.mxu0 0.0
    %263 = vmatprep.subr.mxu0 0.0
    %264 = vmatpush1.msra.mxu0 0.0
    %265 = vmatprep.subr.mxu0 0.0
    %266 = vmatpush1.msra.mxu0 0.0
    %267 = vmatprep.subr.mxu0 0.0
    %268 = vmatpush1.msra.mxu0 0.0
    %269 = vmatprep.subr.mxu0 0.0
    %270 = vmatpush1.msra.mxu0 0.0
    %271 = vmatprep.subr.mxu0 0.0
    %272 = vmatpush1.msra.mxu0 0.0
    %273 = vmatprep.subr.mxu0 0.0
    %274 = vmatpush1.msra.mxu0 0.0
    %275 = vmatprep.subr.mxu0 0.0
    %276 = vmatpush1.msra.mxu0 0.0
    %277 = vmatprep.subr.mxu0 0.0
    %278 = vmatpush1.msra.mxu0 0.0
    %279 = vmatprep.subr.mxu0 0.0
    %280 = vmatpush1.msra.mxu0 0.0
    %281 = vmatprep.subr.mxu0 0.0
    %282 = vmatpush1.msra.mxu0 0.0
    %283 = vmatprep.subr.mxu0 0.0
    %284 = vmatpush1.msra.mxu0 0.0
    %285 = vmatprep.subr.mxu0 0.0
    %286 = vmatpush1.msra.mxu0 %v110
    %287 = vmatprep.subr.mxu0 0.0
    %288 = vmatpush1.msra.mxu0 %v107
    %289 = vmatprep.subr.mxu0 0.0
    %290 = vmatpush2.msra.mxu0 0.0
    %291 = vmatprep.subr.mxu0 0.0
    %292 = vmatpush2.msra.mxu0 0.0
    %293 = vmatprep.subr.mxu0 0.0
    %294 = vmatpush2.msra.mxu0 0.0
    %295 = vmatprep.subr.mxu0 0.0
    %296 = vmatpush2.msra.mxu0 0.0
    %297 = vmatprep.subr.mxu0 0.0
    %298 = vmatpush2.msra.mxu0 0.0
    %299 = vmatprep.subr.mxu0 0.0
    %300 = vmatpush2.msra.mxu0 0.0
    %301 = vmatprep.subr.mxu0 0.0
    %302 = vmatpush2.msra.mxu0 0.0
    %303 = vmatprep.subr.mxu0 0.0
    %304 = vmatpush2.msra.mxu0 0.0
    %305 = vmatprep.subr.mxu0 0.0
    %306 = vmatpush2.msra.mxu0 0.0
    %307 = vmatprep.subr.mxu0 0.0
    %308 = vmatpush2.msra.mxu0 0.0
    %309 = vmatprep.subr.mxu0 0.0
    %310 = vmatpush2.msra.mxu0 0.0
    %311 = vmatprep.subr.mxu0 0.0
    %312 = vmatpush2.msra.mxu0 0.0
    %313 = vmatprep.subr.mxu0 0.0
    %314 = vmatpush2.msra.mxu0 0.0
    %315 = vmatprep.subr.mxu0 0.0
    %316 = vmatpush2.msra.mxu0 0.0
    %317 = vmatprep.subr.mxu0 0.0
    %318 = vmatpush2.msra.mxu0 0.0
    %319 = vmatprep.subr.mxu0 0.0
    %320 = vmatpush2.msra.mxu0 0.0
    %321 = vmatprep.mubr.f32.mxu0 0.0
    %322 = vmatmul.mubr.f32.gmra.mxu0 %v246
    %v323 = vpop.f32.mrf.mxu0
    %v324 = vadd.f32 0.0, %v323
    %v325 = vpop.f32.mrf.mxu0
    %326 = vmatprep.mubr.f32.mxu0 0.0
    %327 = vmatmul.mubr.f32.gmra.mxu0 %v249
    %v328 = vpop.f32.mrf.mxu0
    %v329 = vadd.f32 0.0, %v328
    %v330 = vpop.f32.mrf.mxu0
    %331 = vmatprep.mubr.f32.mxu0 0.0
    %332 = vmatmul.mubr.f32.gmra.mxu0 %v252
    %v333 = vpop.f32.mrf.mxu0
    %v334 = vadd.f32 0.0, %v333
    %v335 = vpop.f32.mrf.mxu0
    %336 = vmatprep.mubr.f32.mxu0 0.0
    %337 = vmatmul.mubr.f32.gmra.mxu0 %v255
    %v338 = vpop.f32.mrf.mxu0
    %v339 = vadd.f32 0.0, %v338
    %v340 = vpop.f32.mrf.mxu0
    %341 = vdwg.mxu0
    %342 = vst [vmem:[#allocation11] sm:$0xff] %v324
    %343 = vst [vmem:[#allocation11 + $0x8] sm:$0xff] %v329
    %344 = vst [vmem:[#allocation11 + $0x10] sm:$0xff] %v334
    %345 = vst [vmem:[#allocation11 + $0x18] sm:$0xff] %v339
    %v346 = vsub.f32 %v184, %v324
    %v347 = vsub.f32 %v187, %v329
    %v348 = vsub.f32 %v192, %v334
    %v349 = vsub.f32 %v195, %v339
    %v350 = vmul.f32 %v346, %v346
    %v351 = vmul.f32 %v347, %v347
    %v352 = vmul.f32 %v348, %v348
    %v353 = vmul.f32 %v349, %v349
    %v354 = vadd.f32 %v350, %v351
    %v355 = vadd.f32 %v354, %v352
    %v356 = vadd.f32 %v355, %v353
    %v357 = vrot.slane %v356, 4
    %v358 = vadd.f32 %v356, %v357
    %v359 = vrot.slane %v358, 2
    %v360 = vadd.f32 %v358, %v359
    %v361 = vrot.slane %v360, 1
    %v362 = vadd.f32 %v360, %v361
    %363 = vadd.xlane.f32.xlu0 %v362
    %v364 = vpop.xlane.xlu0 %363
    %vm365 = vcmask 0
    %366 = vst.msk [vmem:[#allocation12] sm:$0x1] %vm365, %v364
    // Predicated region
    $region26: #{tpu_custom_call.1} parent=1 // pred_check
      _
    $region27: #{tpu_custom_call.1} parent=1 // pred_check_branch
      %368 = sbr.rel (0) target = $region29
    $region28: #{tpu_custom_call.1} parent=1 // pred_region
      %s370 = ssub.s32 256, 256
      %371 = vsyncadd [#allocation4], %s370
      %s372 = sshll.u32 [#allocation5], 4
      %s373 = int_to_ptr.vmem [resolvable:$true] %s372
      %378 = dma.vmem_to_hbm [thread:$0]  %s373, 256, %s5, [#allocation4], 128, 128, 8
    $region29: #{tpu_custom_call.1} parent=1 // pred_fallthru
      _
    // Predicated region
    $region30: #{tpu_custom_call.1} parent=1 // pred_check
      _
    $region31: #{tpu_custom_call.1} parent=1 // pred_check_branch
      %380 = sbr.rel (0) target = $region33
    $region32: #{tpu_custom_call.1} parent=1 // pred_region
      %s382 = ssub.s32 512, 512
      %383 = vsyncadd [#allocation7], %s382
      %s384 = sshll.u32 [#allocation6], 4
      %s385 = int_to_ptr.vmem [resolvable:$true] %s384
      %390 = dma.vmem_to_hbm [thread:$0]  %s385, 512, %s6, [#allocation7], 128, 128, 8
    $region33: #{tpu_custom_call.1} parent=1 // pred_fallthru
      _
    // Predicated region
    $region34: #{tpu_custom_call.1} parent=1 // pred_check
      _
    $region35: #{tpu_custom_call.1} parent=1 // pred_check_branch
      %392 = sbr.rel (0) target = $region37
    $region36: #{tpu_custom_call.1} parent=1 // pred_region
      %s394 = ssub.s32 32, 32
      %395 = vsyncadd [#allocation7], %s394
      %s396 = sshll.u32 [#allocation8], 4
      %s397 = int_to_ptr.vmem [resolvable:$true] %s396
      %402 = dma.vmem_to_hbm [thread:$0]  %s397, 32, %s7, [#allocation7], 16, 16, 1
    $region37: #{tpu_custom_call.1} parent=1 // pred_fallthru
      _
    // Predicated region
    $region38: #{tpu_custom_call.1} parent=1 // pred_check
      _
    $region39: #{tpu_custom_call.1} parent=1 // pred_check_branch
      %404 = sbr.rel (0) target = $region41
    $region40: #{tpu_custom_call.1} parent=1 // pred_region
      %s406 = ssub.s32 32, 32
      %407 = vsyncadd [#allocation10], %s406
      %s408 = sshll.u32 [#allocation9], 4
      %s409 = int_to_ptr.vmem [resolvable:$true] %s408
      %414 = dma.vmem_to_hbm [thread:$0]  %s409, 32, %s8, [#allocation10], 16, 16, 1
    $region41: #{tpu_custom_call.1} parent=1 // pred_fallthru
      _
    // Predicated region
    $region42: #{tpu_custom_call.1} parent=1 // pred_check
      _
    $region43: #{tpu_custom_call.1} parent=1 // pred_check_branch
      %416 = sbr.rel (0) target = $region45
    $region44: #{tpu_custom_call.1} parent=1 // pred_region
      %s418 = ssub.s32 512, 512
      %419 = vsyncadd [#allocation10], %s418
      %s420 = sshll.u32 [#allocation11], 4
      %s421 = int_to_ptr.vmem [resolvable:$true] %s420
      %426 = dma.vmem_to_hbm [thread:$0]  %s421, 512, %s9, [#allocation10], 128, 128, 8
    $region45: #{tpu_custom_call.1} parent=1 // pred_fallthru
      _
    // Predicated region
    $region46: #{tpu_custom_call.1} parent=1 // pred_check
      _
    $region47: #{tpu_custom_call.1} parent=1 // pred_check_branch
      %428 = sbr.rel (0) target = $region49
    $region48: #{tpu_custom_call.1} parent=1 // pred_region
      %s430 = ssub.s32 16, 16
      %431 = vsyncadd [#allocation13], %s430
      %s433 = sshll.u32 [#allocation12], 4
      %s434 = int_to_ptr.vmem [resolvable:$true] %s433
      %436 = dma.vmem_to_hbm [thread:$0]  %s434, 16, %s10, [#allocation13]
    $region49: #{tpu_custom_call.1} parent=1 // pred_fallthru
      _
    // Predicated region
    $region50: #{tpu_custom_call.1} parent=1 // pred_check
      _
    $region51: #{tpu_custom_call.1} parent=1 // pred_check_branch
      %438 = sbr.rel (0) target = $region53
    $region52: #{tpu_custom_call.1} parent=1 // pred_region
      %439 = dma.done [#allocation4], 256
    $region53: #{tpu_custom_call.1} parent=1 // pred_fallthru
      _
    // Predicated region
    $region54: #{tpu_custom_call.1} parent=1 // pred_check
      _
    $region55: #{tpu_custom_call.1} parent=1 // pred_check_branch
      %441 = sbr.rel (0) target = $region57
    $region56: #{tpu_custom_call.1} parent=1 // pred_region
      %442 = dma.done [#allocation7], 512
    $region57: #{tpu_custom_call.1} parent=1 // pred_fallthru
      _
    // Predicated region
    $region58: #{tpu_custom_call.1} parent=1 // pred_check
      _
    $region59: #{tpu_custom_call.1} parent=1 // pred_check_branch
      %444 = sbr.rel (0) target = $region61
    $region60: #{tpu_custom_call.1} parent=1 // pred_region
      %445 = dma.done [#allocation7], 32
    $region61: #{tpu_custom_call.1} parent=1 // pred_fallthru
      _
    // Predicated region
    $region62: #{tpu_custom_call.1} parent=1 // pred_check
      _
    $region63: #{tpu_custom_call.1} parent=1 // pred_check_branch
      %447 = sbr.rel (0) target = $region65
    $region64: #{tpu_custom_call.1} parent=1 // pred_region
      %448 = dma.done [#allocation10], 32
    $region65: #{tpu_custom_call.1} parent=1 // pred_fallthru
      _
    // Predicated region
    $region66: #{tpu_custom_call.1} parent=1 // pred_check
      _
    $region67: #{tpu_custom_call.1} parent=1 // pred_check_branch
      %450 = sbr.rel (0) target = $region69
    $region68: #{tpu_custom_call.1} parent=1 // pred_region
      %451 = dma.done [#allocation10], 512
    $region69: #{tpu_custom_call.1} parent=1 // pred_fallthru
      _
    // Predicated region
    $region70: #{tpu_custom_call.1} parent=1 // pred_check
      _
    $region71: #{tpu_custom_call.1} parent=1 // pred_check_branch
      %453 = sbr.rel (0) target = $region73
    $region72: #{tpu_custom_call.1} parent=1 // pred_region
      %454 = dma.done [#allocation13], 16
    $region73: #{tpu_custom_call.1} parent=1 // pred_fallthru
      _
    %455 = vsyncpa [#allocation3], 1
    %456 = vsyncpa [#allocation4], 1
    %457 = vsyncpa [#allocation7], 1
    %458 = vsyncpa [#allocation10], 1
    %459 = vsyncpa [#allocation13], 1

</llo_original>
